<compile_context>
chip_gen: v7x
topology: tpu7x:2x2x1
jax: 0.10.0
libtpu: 0.0.40
codegen_flags: <defaults>
</compile_context>

<pallas_src>
import functools

import jax
import jax.numpy as jnp
import numpy as np
from jax.experimental import pallas as pl
from jax.experimental.pallas import tpu as pltpu


# ----------------------------------------------------------------------------
# Kernels
# ----------------------------------------------------------------------------
def _ln_math(x_f32, w_f32, eps):
    """Normalize rows of x_f32 over the last dim; all math in f32."""
    mean = jnp.mean(x_f32, axis=-1, keepdims=True)          # (tr, 1)
    xc = x_f32 - mean
    var = jnp.mean(xc * xc, axis=-1, keepdims=True)         # biased variance (matches F.layer_norm)
    inv = jax.lax.rsqrt(var + eps)                          # EUP rsqrt; VPU/XLU slots stay free
    return xc * inv * w_f32


def _layernorm_kernel_bias(x_ref, w_ref, b_ref, o_ref, *, eps: float):
    x = x_ref[...].astype(jnp.float32)                      # (tr, C) f32 working copy
    y = _ln_math(x, w_ref[...].astype(jnp.float32), eps) + b_ref[...].astype(jnp.float32)
    o_ref[...] = y.astype(o_ref.dtype)


def _layernorm_kernel_nobias(x_ref, w_ref, o_ref, *, eps: float):
    x = x_ref[...].astype(jnp.float32)
    y = _ln_math(x, w_ref[...].astype(jnp.float32), eps)
    o_ref[...] = y.astype(o_ref.dtype)


# ----------------------------------------------------------------------------
# Tile selection: byte budget, dtype-aware sublane alignment
# ----------------------------------------------------------------------------
def _sublane_align(itemsize: int) -> int:
    # f32 -> 8 rows/vreg, bf16 -> 16 (packed pairs), int8/fp8 -> 32 (packed quads)
    if itemsize >= 4:
        return 8
    if itemsize == 2:
        return 16
    return 32


def _pick_block_rows(rows: int, C: int, in_itemsize: int, out_itemsize: int,
                     target_block_bytes: int, max_footprint_bytes: int) -> int:
    """Row tile so the x block is ~target_block_bytes and the whole pipelined
    footprint (2x in + 2x out double buffers + ~2x f32 working set) stays under budget."""
    align = _sublane_align(in_itemsize)
    per_row_in = C * in_itemsize
    # bytes per row across the pipeline: 2x in + 2x out + 2x f32 temporaries (conservative)
    per_row_footprint = C * (2 * in_itemsize + 2 * out_itemsize + 2 * 4)

    tr = max(align, (target_block_bytes // max(per_row_in, 1)) // align * align)
    max_tr = max(align, (max_footprint_bytes // max(per_row_footprint, 1)) // align * align)
    tr = min(tr, max_tr)

    if tr >= rows:
        return rows                                          # full-dim block is always legal
    return tr


def _block_footprint_bytes(tr: int, C: int, in_itemsize: int, out_itemsize: int) -> int:
    per_row = C * (2 * in_itemsize + 2 * out_itemsize + 2 * 4)
    params = 2 * 2 * C * 4                                    # resident weight (+bias), double-buffered, <=f32
    return tr * per_row + params


# ----------------------------------------------------------------------------
# Wrapper
# ----------------------------------------------------------------------------
def layer_norm(x, weight, bias=None, *, eps: float = 1e-5,
               target_block_bytes: int = 2 << 20,            # ~2 MiB x block (>=1 MiB amortizes grid-step overhead)
               max_footprint_bytes: int = 20 << 20):         # fits v7x 64 MiB physical VMEM with headroom
    """LayerNorm over the last dim of x. weight: (C,), bias: (C,) or None.
    Matches torch.nn.functional.layer_norm(x, (C,), weight, bias, eps)."""
    orig_shape = x.shape
    C = int(orig_shape[-1])
    rows = 1
    for d in orig_shape[:-1]:
        rows *= int(d)
    rows = max(rows, 1)

    x2 = x.reshape(rows, C)
    w2 = weight.reshape(1, C)
    has_bias = bias is not None

    in_itemsize = jnp.dtype(x.dtype).itemsize
    out_itemsize = in_itemsize                                # output dtype == input dtype
    tr = _pick_block_rows(rows, C, in_itemsize, out_itemsize,
                          target_block_bytes, max_footprint_bytes)
    grid = (pl.cdiv(rows, tr),)                               # partial last block: Pallas masks the OOB store

    footprint = _block_footprint_bytes(tr, C, in_itemsize, out_itemsize)
    vmem_limit = int(min(max(footprint + (2 << 20), 8 << 20), 48 << 20))

    in_specs = [
        pl.BlockSpec((tr, C), lambda i: (i, 0)),              # x rows: streamed block per step
        pl.BlockSpec((1, C), lambda i: (0, 0)),               # weight: resident, constant index
    ]
    args = [x2, w2]
    if has_bias:
        in_specs.append(pl.BlockSpec((1, C), lambda i: (0, 0)))  # bias: resident
        args.append(bias.reshape(1, C))
        kernel = functools.partial(_layernorm_kernel_bias, eps=eps)
    else:
        kernel = functools.partial(_layernorm_kernel_nobias, eps=eps)

    out = pl.pallas_call(
        kernel,
        out_shape=jax.ShapeDtypeStruct((rows, C), x.dtype),
        grid_spec=pltpu.PrefetchScalarGridSpec(
            num_scalar_prefetch=0,
            grid=grid,
            in_specs=in_specs,
            out_specs=pl.BlockSpec((tr, C), lambda i: (i, 0)),  # lane-dense full-C output slab
        ),
        compiler_params=pltpu.CompilerParams(
            dimension_semantics=("parallel",),                  # shards row blocks across TCs on v7x
            vmem_limit_bytes=vmem_limit,
        ),
    )(*args)
    return out.reshape(orig_shape)


# ----------------------------------------------------------------------------
# Reference + test
# ----------------------------------------------------------------------------
def _reference(x, weight, bias, eps=1e-5):
    """Pure-JAX reference matching F.layer_norm(x, (C,), weight, bias, eps), f32 math."""
    xf = x.astype(jnp.float32)
    mean = jnp.mean(xf, axis=-1, keepdims=True)
    var = jnp.mean((xf - mean) ** 2, axis=-1, keepdims=True)
    y = (xf - mean) / jnp.sqrt(var + eps) * weight.astype(jnp.float32)
    if bias is not None:
        y = y + bias.astype(jnp.float32)
    return y.astype(x.dtype)


if __name__ == "__main__":
    # Small nanoGPT-like config: batch=2, seq=8, n_embd=32.
    B, T, C = 2, 8, 32

    key = jax.random.PRNGKey(0)
    k1, k2, k3 = jax.random.split(key, 3)
    x = jax.random.normal(k1, (B, T, C), dtype=jnp.float32)
    weight = 1.0 + 0.1 * jax.random.normal(k2, (C,), dtype=jnp.float32)
    bias = 0.1 * jax.random.normal(k3, (C,), dtype=jnp.float32)

    # bias=True path
    out = jax.block_until_ready(layer_norm(x, weight, bias))
    ref = _reference(x, weight, bias)
    np.testing.assert_allclose(np.asarray(out), np.asarray(ref), atol=1e-4, rtol=1e-4)

    # bias=False path (nanoGPT LayerNorm with bias=None) -> compiles the bias-free kernel
    out_nb = jax.block_until_ready(layer_norm(x, weight, None))
    ref_nb = _reference(x, weight, None)
    np.testing.assert_allclose(np.asarray(out_nb), np.asarray(ref_nb), atol=1e-4, rtol=1e-4)

    # Non-divisible row count + tiny block budget -> exercises the cdiv / partial-last-block path.
    x_odd = jax.random.normal(k3, (2, 13, C), dtype=jnp.float32)
    out_odd = jax.block_until_ready(
        layer_norm(x_odd, weight, bias, target_block_bytes=1024))
    ref_odd = _reference(x_odd, weight, bias)
    np.testing.assert_allclose(np.asarray(out_odd), np.asarray(ref_odd), atol=1e-4, rtol=1e-4)

    # bf16 path -> exercises dtype-aware sublane alignment and f32 internal accumulation.
    x_bf = x.astype(jnp.bfloat16)
    out_bf = jax.block_until_ready(layer_norm(x_bf, weight.astype(jnp.bfloat16),
                                              bias.astype(jnp.bfloat16)))
    ref_bf = _reference(x_bf, weight.astype(jnp.bfloat16), bias.astype(jnp.bfloat16))
    np.testing.assert_allclose(np.asarray(out_bf, dtype=np.float32),
                               np.asarray(ref_bf, dtype=np.float32), atol=3e-2, rtol=3e-2)

    print("KERNEL_OK")
</pallas_src>

<mosaic_0001>
module attributes {stable_mosaic.version = 11 : i64} {
  func.func @_layernorm_kernel_bias(%arg0: i32, %arg1: memref<16x32xf32, #tpu.memory_space<vmem>>, %arg2: memref<1x32xf32, #tpu.memory_space<vmem>>, %arg3: memref<1x32xf32, #tpu.memory_space<vmem>>, %arg4: memref<16x32xf32, #tpu.memory_space<vmem>>) attributes {dimension_semantics = [#tpu.dimension_semantics<parallel>], iteration_bounds = array<i64: 1>, scalar_prefetch = 0 : i64, scratch_operands = 0 : i64, tpu.core_type = #tpu.core_type<tc>, window_params = [{transform_indices = @transform_0, window_bounds = array<i64: 16, 32>}, {pipeline_mode = #tpu.pipeline_mode<synchronous>, transform_indices = @transform_1, window_bounds = array<i64: 1, 32>}, {pipeline_mode = #tpu.pipeline_mode<synchronous>, transform_indices = @transform_2, window_bounds = array<i64: 1, 32>}, {transform_indices = @transform_3, window_bounds = array<i64: 16, 32>}]} {
    %c0 = arith.constant 0 : index
    %c0_0 = arith.constant 0 : index
    %0 = vector.load %arg1[%c0, %c0_0] : memref<16x32xf32, #tpu.memory_space<vmem>>, vector<16x32xf32>
    %c0_1 = arith.constant 0 : index
    %c0_2 = arith.constant 0 : index
    %1 = vector.load %arg2[%c0_1, %c0_2] : memref<1x32xf32, #tpu.memory_space<vmem>>, vector<1x32xf32>
    %cst = arith.constant dense<0.000000e+00> : vector<16xf32>
    %2 = vector.multi_reduction <add>, %0, %cst [1] : vector<16x32xf32> to vector<16xf32>
    %3 = vector.shape_cast %2 : vector<16xf32> to vector<16x1xf32>
    %cst_3 = arith.constant 3.200000e+01 : f32
    %4 = vector.broadcast %cst_3 : f32 to vector<16x1xf32>
    %5 = arith.divf %3, %4 : vector<16x1xf32>
    %6 = vector.broadcast %5 : vector<16x1xf32> to vector<16x32xf32>
    %7 = arith.subf %0, %6 : vector<16x32xf32>
    %8 = arith.mulf %7, %7 : vector<16x32xf32>
    %cst_4 = arith.constant dense<0.000000e+00> : vector<16xf32>
    %9 = vector.multi_reduction <add>, %8, %cst_4 [1] : vector<16x32xf32> to vector<16xf32>
    %10 = vector.shape_cast %9 : vector<16xf32> to vector<16x1xf32>
    %cst_5 = arith.constant 3.200000e+01 : f32
    %11 = vector.broadcast %cst_5 : f32 to vector<16x1xf32>
    %12 = arith.divf %10, %11 : vector<16x1xf32>
    %cst_6 = arith.constant 9.99999974E-6 : f32
    %13 = vector.broadcast %cst_6 : f32 to vector<16x1xf32>
    %14 = arith.addf %12, %13 : vector<16x1xf32>
    %15 = math.rsqrt %14 : vector<16x1xf32>
    %16 = vector.broadcast %15 : vector<16x1xf32> to vector<16x32xf32>
    %17 = arith.mulf %7, %16 : vector<16x32xf32>
    %18 = vector.broadcast %1 : vector<1x32xf32> to vector<16x32xf32>
    %19 = arith.mulf %17, %18 : vector<16x32xf32>
    %c0_7 = arith.constant 0 : index
    %c0_8 = arith.constant 0 : index
    %20 = vector.load %arg3[%c0_7, %c0_8] : memref<1x32xf32, #tpu.memory_space<vmem>>, vector<1x32xf32>
    %21 = vector.broadcast %20 : vector<1x32xf32> to vector<16x32xf32>
    %22 = arith.addf %19, %21 : vector<16x32xf32>
    %c0_9 = arith.constant 0 : index
    %c0_10 = arith.constant 0 : index
    %23 = vector.load %arg4[%c0_9, %c0_10] : memref<16x32xf32, #tpu.memory_space<vmem>>, vector<16x32xf32>
    tpu.vector_store %arg4[%c0_9, %c0_10], %22 {strides = array<i32>} : memref<16x32xf32, #tpu.memory_space<vmem>>, vector<16x32xf32>,
    return
  }
  func.func @transform_0(%arg0: i32) -> (i32, i32) {
    %c0_i32 = arith.constant 0 : i32
    %c0_i32_0 = arith.constant 0 : i32
    return %arg0, %c0_i32 : i32, i32
  }
  func.func @transform_1(%arg0: i32) -> (i32, i32) {
    %c0_i32 = arith.constant 0 : i32
    %c0_i32_0 = arith.constant 0 : i32
    %c0_i32_1 = arith.constant 0 : i32
    return %c0_i32, %c0_i32_0 : i32, i32
  }
  func.func @transform_2(%arg0: i32) -> (i32, i32) {
    %c0_i32 = arith.constant 0 : i32
    %c0_i32_0 = arith.constant 0 : i32
    %c0_i32_1 = arith.constant 0 : i32
    return %c0_i32, %c0_i32_0 : i32, i32
  }
  func.func @transform_3(%arg0: i32) -> (i32, i32) {
    %c0_i32 = arith.constant 0 : i32
    %c0_i32_0 = arith.constant 0 : i32
    return %arg0, %c0_i32 : i32, i32
  }
}

</mosaic_0001>

<llo_original>
// kernel: tpu_custom_call.1
$region0: #{tpu_custom_call.1}
  #allocation0 [shape = 'u32[]', space=smem, size = 0x4, offset = 0x4, fixed_abs, tag = 'smem constant byte address 0x4 - core index']
  #allocation1 [shape = 'u32[144,128]{1,0:T(1,128)}', space=vmem, size = 0x12000, scoped, tag = 'internal scratch']
  %s0 = inlined_call_operand.hbm [shape: f32[16,32], index: 0, kind: input, shape index: {}]
  %s1 = inlined_call_operand.vmem [shape: f32[1,32], index: 1, kind: input, shape index: {}]
  %s2 = inlined_call_operand.vmem [shape: f32[1,32], index: 2, kind: input, shape index: {}]
  %s3 = inlined_call_operand.hbm [shape: f32[16,32], index: 3, kind: output, shape index: {}]
  %s4 = sld [smem:[#allocation0]]
  $region26: #{tpu_custom_call.1} parent=0
    _
  %s6 = ssub.s32 1, %s4
  %s7 = scalar_select 0, %s6, %s4
  $region1: #{tpu_custom_call.1} parent=0
    #allocation2 [shape = 'u8[8192]{0}', space=vmem, size = 0x2000, scoped, tag = 'input window, operand 0, single buffered']
    #allocation3 [shape = 's32[1]{0}', space=sflag, size = 0x4, scoped, tag = 'scoped memory for tpu_custom_call.1']
    #allocation4 [shape = 's32[1]{0}', space=sflag, size = 0x4, scoped, tag = 'scoped memory for tpu_custom_call.1']
    #allocation5 [shape = 'u8[8192]{0}', space=vmem, size = 0x2000, scoped, tag = 'output window, operand 0, single buffered']
    %8 = vsyncpa [#allocation3], 0
    %9 = vsyncpa [#allocation4], 0
    // Predicated region
    $region2: #{tpu_custom_call.1} parent=1 // pred_check
      _
    $region3: #{tpu_custom_call.1} parent=1 // pred_check_branch
      %11 = sbr.rel (0) target = $region5
    $region4: #{tpu_custom_call.1} parent=1 // pred_region
      %s13 = ssub.s32 256, 256
      %14 = vsyncadd [#allocation3], %s13
      %s15 = sshll.u32 [#allocation2], 4
      %s16 = int_to_ptr.vmem [resolvable:$true] %s15
      %21 = dma.hbm_to_vmem [thread:$0]  %s0, 256, %s16, [#allocation3], 128, 128, 8
    $region5: #{tpu_custom_call.1} parent=1 // pred_fallthru
      _
    // Predicated region
    $region6: #{tpu_custom_call.1} parent=1 // pred_check
      _
    $region7: #{tpu_custom_call.1} parent=1 // pred_check_branch
      %23 = sbr.rel (0) target = $region9
    $region8: #{tpu_custom_call.1} parent=1 // pred_region
      _
    $region9: #{tpu_custom_call.1} parent=1 // pred_fallthru
      _
    // Predicated region
    $region10: #{tpu_custom_call.1} parent=1 // pred_check
      _
    $region11: #{tpu_custom_call.1} parent=1 // pred_check_branch
      %25 = sbr.rel (0) target = $region13
    $region12: #{tpu_custom_call.1} parent=1 // pred_region
      _
    $region13: #{tpu_custom_call.1} parent=1 // pred_fallthru
      _
    // Predicated region
    $region14: #{tpu_custom_call.1} parent=1 // pred_check
      _
    $region15: #{tpu_custom_call.1} parent=1 // pred_check_branch
      %27 = sbr.rel (0) target = $region17
    $region16: #{tpu_custom_call.1} parent=1 // pred_region
      %28 = dma.done [#allocation3], 256
    $region17: #{tpu_custom_call.1} parent=1 // pred_fallthru
      _
    %v29 = vld [vmem:[#allocation2] sm:$0xff]
    %v30 = vld [vmem:[#allocation2 + $0x8] sm:$0xff]
    %v31 = vld [vmem:[%s1] sm:$0x1]
    %vm32 = vcmask 261120
    %v33 = vsel %vm32, %v29, 0.0
    %34 = vadd.xlane.f32.xlu0 %v33
    %v35 = vpop.xlane.xlu0 %34
    %v36 = vsel %vm32, %v30, 0.0
    %37 = vadd.xlane.f32.xlu0 %v36
    %v38 = vpop.xlane.xlu0 %37
    %v39 = vrcp.pop 32.0
    %v40 = vmul.f32 %v35, %v39
    %v41 = vmul.f32 %v38, %v39
    %v42 = vsub.f32 %v29, %v40
    %v43 = vsub.f32 %v30, %v41
    %v44 = vmul.f32 %v42, %v42
    %v45 = vmul.f32 %v43, %v43
    %v46 = vsel %vm32, %v44, 0.0
    %47 = vadd.xlane.f32.xlu0 %v46
    %v48 = vpop.xlane.xlu0 %47
    %v49 = vsel %vm32, %v45, 0.0
    %50 = vadd.xlane.f32.xlu0 %v49
    %v51 = vpop.xlane.xlu0 %50
    %v52 = vmul.f32 %v48, %v39
    %v53 = vmul.f32 %v51, %v39
    %v54 = vadd.f32 %v52, 1e-05
    %v55 = vadd.f32 %v53, 1e-05
    %v56 = vrsqrt.pop %v54
    %v57 = vrsqrt.pop %v55
    %v58 = vmul.f32 %v42, %v56
    %v59 = vmul.f32 %v43, %v57
    %v61 = vlaneseq
    %v62 = vshrl.u32 %v61, 7
    %v63 = vsub.s32 0, %v62
    %v64 = vrot.slane %v31, %v63
    %v66 = vmul.f32 %v58, %v64
    %v67 = vmul.f32 %v59, %v64
    %v68 = vld [vmem:[%s2] sm:$0x1]
    %v70 = vlaneseq
    %v71 = vshrl.u32 %v70, 7
    %v72 = vsub.s32 0, %v71
    %v73 = vrot.slane %v68, %v72
    %v75 = vadd.f32 %v66, %v73
    %v76 = vadd.f32 %v67, %v73
    %77 = vst.msk [vmem:[#allocation5] sm:$0xff] %vm32, %v75
    %78 = vst.msk [vmem:[#allocation5 + $0x8] sm:$0xff] %vm32, %v76
    // Predicated region
    $region18: #{tpu_custom_call.1} parent=1 // pred_check
      _
    $region19: #{tpu_custom_call.1} parent=1 // pred_check_branch
      %80 = sbr.rel (0) target = $region21
    $region20: #{tpu_custom_call.1} parent=1 // pred_region
      %s82 = ssub.s32 256, 256
      %83 = vsyncadd [#allocation4], %s82
      %s84 = sshll.u32 [#allocation5], 4
      %s85 = int_to_ptr.vmem [resolvable:$true] %s84
      %90 = dma.vmem_to_hbm [thread:$0]  %s85, 256, %s3, [#allocation4], 128, 128, 8
    $region21: #{tpu_custom_call.1} parent=1 // pred_fallthru
      _
    // Predicated region
    $region22: #{tpu_custom_call.1} parent=1 // pred_check
      _
    $region23: #{tpu_custom_call.1} parent=1 // pred_check_branch
      %92 = sbr.rel (0) target = $region25
    $region24: #{tpu_custom_call.1} parent=1 // pred_region
      %93 = dma.done [#allocation4], 256
    $region25: #{tpu_custom_call.1} parent=1 // pred_fallthru
      _
    %94 = vsyncpa [#allocation3], 1
    %95 = vsyncpa [#allocation4], 1

</llo_original>
